<compile_context>
chip_gen: v7x
topology: tpu7x:2x2x1
jax: 0.10.0
libtpu: 0.0.40
codegen_flags: <defaults>
</compile_context>

<pallas_src>
import functools

import jax
import jax.numpy as jnp
import numpy as np
from jax import lax
from jax.experimental import pallas as pl
from jax.experimental.pallas import tpu as pltpu


def _round_up(x, m):
    return (x + m - 1) // m * m


# ----------------------------- Pallas kernel ---------------------------------
def _rib_kernel(x_ref,            # (Cin, Lw)       Lw = batch_block * L (batch folded on lanes)
                w1_ref, b1_ref,   # fused stage-1:  (2*Cin_p + Cout_p, Cin), (same, 1)
                w2_ref, b2_ref,   # fused stage-2:  (3*Cout_p, 2*Cin_p),     (Cout, 1)
                o_ref,            # (Cout, Lw)
                *, cin_p, cout, cout_p, seq_len, use_bf16):
    x = x_ref[...]                                        # f32 (Cin, Lw)
    w1 = w1_ref[...]
    w2 = w2_ref[...]
    cdt = jnp.bfloat16 if use_bf16 else jnp.float32       # dot-input dtype (bf16 on v6e/v7x)

    # ---- stage 1: ONE wide matmul -> [h0 ; h1 ; res] stacked on sublanes ----
    hall = jnp.dot(w1.astype(cdt), x.astype(cdt),
                   preferred_element_type=jnp.float32) + b1_ref[...]
    h01 = jnp.maximum(hall[: 2 * cin_p], 0.0)             # rows [0:Cin_p)=h0, [Cin_p:2Cin_p)=h1
    res = hall[2 * cin_p: 2 * cin_p + cout]               # residual 1x1: no BN, no ReLU

    # ---- stage 2: ONE matmul on the already-stacked [h0 ; h1] (no concat, no shifted inputs) ----
    # Stacked output row segments (stride Cout_p, sublane-aligned):
    #   [0       : Cout)  branch0 k=1 on h0  +  branch1 center tap on h1
    #   [Cout_p  : +Cout) branch1 tap t=0 on h1  -> contributes to column l from column l-1
    #   [2*Cout_p: +Cout) branch1 tap t=2 on h1  -> contributes to column l from column l+1
    p = jnp.dot(w2.astype(cdt), h01.astype(cdt), preferred_element_type=jnp.float32)
    center = p[:cout]
    p_prev = p[cout_p: cout_p + cout]
    p_next = p[2 * cout_p: 2 * cout_p + cout]

    # ---- shift the partial OUTPUTS with pltpu.roll (XLU) + one hoisted iota mask ----
    lw = x.shape[1]
    col = lax.broadcasted_iota(jnp.int32, (cout, lw), 1)
    if (seq_len & (seq_len - 1)) == 0:                     # position within each folded sequence
        pos = jnp.bitwise_and(col, seq_len - 1)
    else:
        pos = col % seq_len
    sh_prev = jnp.where(pos == 0, 0.0, pltpu.roll(p_prev, shift=1, axis=1))
    sh_next = jnp.where(pos == seq_len - 1, 0.0, pltpu.roll(p_next, shift=lw - 1, axis=1))

    # inner per-branch ReLU (post conv+BN), then residual add + outer ReLU
    y = jnp.maximum(center + sh_prev + sh_next + b2_ref[...], 0.0)
    o_ref[...] = jnp.maximum(y + res, 0.0)                 # single lane-dense (Cout, Lw) store


# ------------------------------ wrapper ---------------------------------------
def residual_inception_block(x_ncl, packed, *, batch_block=None, use_bf16=False):
    """x_ncl: (N, Cin, L) float32 (PyTorch NCL). Returns (N, Cout, L) float32."""
    N, Cin, L = x_ncl.shape
    Cout = packed["b2"].shape[0]
    M1 = packed["w1"].shape[0]
    M2, K2 = packed["w2"].shape
    cin_p = packed["cin_p"]
    cout_p = packed["cout_p"]

    if batch_block is None:
        # Largest batch fold that still leaves >=2 parallel grid steps (v7x: 2 TensorCores).
        batch_block = 1
        for nb in range(N, 0, -1):
            if N % nb == 0 and (N // nb) >= min(2, N):
                batch_block = nb
                break
    assert N % batch_block == 0
    G = N // batch_block
    Lw = batch_block * L

    # Fold batch into the lane axis: (N, Cin, L) -> (G, Cin, nb*L)  (one wrapper transpose).
    xg = x_ncl.reshape(G, batch_block, Cin, L).transpose(0, 2, 1, 3).reshape(G, Cin, Lw)

    kernel = functools.partial(_rib_kernel, cin_p=cin_p, cout=Cout, cout_p=cout_p,
                               seq_len=L, use_bf16=use_bf16)
    const = lambda shape: pl.BlockSpec(shape, lambda g: (0,) * len(shape))

    grid_spec = pltpu.PrefetchScalarGridSpec(
        num_scalar_prefetch=0,
        grid=(G,),
        in_specs=[
            pl.BlockSpec((pl.Squeezed(), Cin, Lw), lambda g: (g, 0, 0)),   # x (per batch group)
            const((M1, Cin)), const((M1, 1)),                              # fused stage-1
            const((M2, K2)), const((Cout, 1)),                             # fused stage-2
        ],
        out_specs=pl.BlockSpec((pl.Squeezed(), Cout, Lw), lambda g: (g, 0, 0)),
    )

    out_g = pl.pallas_call(
        kernel,
        out_shape=jax.ShapeDtypeStruct((G, Cout, Lw), jnp.float32),
        grid_spec=grid_spec,
        compiler_params=pltpu.CompilerParams(
            dimension_semantics=("parallel",),
            vmem_limit_bytes=32 * 1024 * 1024,   # explicit; tiles here are < 100 KiB, safe on v5e/v6e/v7x
        ),
    )(xg, packed["w1"], packed["b1"], packed["w2"], packed["b2"])

    # Un-fold the batch: (G, Cout, nb*L) -> (N, Cout, L)
    return out_g.reshape(G, Cout, batch_block, L).transpose(0, 2, 1, 3).reshape(N, Cout, L)


# ------------------------ parameter construction (glue) -----------------------
def make_raw_params(key, in_channels, out_channels, kernel_sizes=(1, 3)):
    """Raw per-layer conv weights/biases + BatchNorm running stats (PyTorch convention)."""
    Cin, Cout = in_channels, out_channels
    Cb = Cout // len(kernel_sizes)
    it = iter(jax.random.split(key, 64))
    nxt = lambda: next(it)

    def conv(co, ci, k):
        w = 0.3 * jax.random.normal(nxt(), (co, ci, k), jnp.float32)
        b = 0.1 * jax.random.normal(nxt(), (co,), jnp.float32)
        return w, b

    def bn(c):
        return dict(gamma=1.0 + 0.1 * jax.random.normal(nxt(), (c,), jnp.float32),
                    beta=0.1 * jax.random.normal(nxt(), (c,), jnp.float32),
                    mean=0.1 * jax.random.normal(nxt(), (c,), jnp.float32),
                    var=1.0 + 0.2 * jax.random.uniform(nxt(), (c,), jnp.float32))

    raw = {
        "b0c1": conv(Cin, Cin, 1), "b0bn1": bn(Cin),
        "b0c2": conv(Cb, Cin, kernel_sizes[0]), "b0bn2": bn(Cb),
        "b1c1": conv(Cin, Cin, 1), "b1bn1": bn(Cin),
        "b1c2": conv(Cb, Cin, kernel_sizes[1]), "b1bn2": bn(Cb),
        "res": conv(Cout, Cin, 1),     # residual 1x1 (in_channels != out_channels here)
    }
    return raw


def _fold_bn(w, b, bnp, eps=1e-5):
    """Fold an eval-mode BatchNorm1d that follows a conv into the conv weight/bias."""
    s = bnp["gamma"] / jnp.sqrt(bnp["var"] + eps)
    return w * s[:, None, None], (b - bnp["mean"]) * s + bnp["beta"]


def pack_params(raw, in_channels, out_channels):
    """Build the fused stage-1 / stage-2 matrices consumed by the kernel."""
    Cin, Cout = in_channels, out_channels
    Cb = Cout // 2
    Cin_p = _round_up(Cin, 8)          # 8-sublane aligned segments -> tile-aligned slices
    Cout_p = _round_up(Cout, 8)

    w10, b10 = _fold_bn(*raw["b0c1"], raw["b0bn1"])    # (Cin, Cin, 1)
    w20, b20 = _fold_bn(*raw["b0c2"], raw["b0bn2"])    # (Cb,  Cin, 1)
    w11, b11 = _fold_bn(*raw["b1c1"], raw["b1bn1"])    # (Cin, Cin, 1)
    w21, b21 = _fold_bn(*raw["b1c2"], raw["b1bn2"])    # (Cb,  Cin, 3)
    wres, bres = raw["res"]                            # (Cout, Cin, 1), no BN

    # ---- stage 1: rows [0:Cin)=branch0 1x1, [Cin_p:+Cin)=branch1 1x1, [2*Cin_p:+Cout)=residual ----
    M1 = 2 * Cin_p + Cout_p
    W1 = np.zeros((M1, Cin), np.float32)
    B1 = np.zeros((M1, 1), np.float32)
    W1[:Cin] = np.asarray(w10[:, :, 0]);                 B1[:Cin, 0] = np.asarray(b10)
    W1[Cin_p:Cin_p + Cin] = np.asarray(w11[:, :, 0]);    B1[Cin_p:Cin_p + Cin, 0] = np.asarray(b11)
    W1[2 * Cin_p:2 * Cin_p + Cout] = np.asarray(wres[:, :, 0])
    B1[2 * Cin_p:2 * Cin_p + Cout, 0] = np.asarray(bres)

    # ---- stage 2: one matmul on [h0 ; h1]; stacked output segments [center ; tap0 ; tap2] ----
    K2 = 2 * Cin_p
    M2 = 3 * Cout_p
    W2 = np.zeros((M2, K2), np.float32)
    B2 = np.zeros((Cout, 1), np.float32)
    # center segment: branch0 (k=1) on h0 + branch1 center tap on h1
    W2[:Cb, :Cin] = np.asarray(w20[:, :, 0])
    W2[Cb:Cout, Cin_p:Cin_p + Cin] = np.asarray(w21[:, :, 1])
    # tap t=0 segment (only branch1 rows non-zero): contributes to column l from column l-1
    W2[Cout_p + Cb:Cout_p + Cout, Cin_p:Cin_p + Cin] = np.asarray(w21[:, :, 0])
    # tap t=2 segment: contributes to column l from column l+1
    W2[2 * Cout_p + Cb:2 * Cout_p + Cout, Cin_p:Cin_p + Cin] = np.asarray(w21[:, :, 2])
    B2[:Cb, 0] = np.asarray(b20)
    B2[Cb:, 0] = np.asarray(b21)

    return dict(w1=jnp.asarray(W1), b1=jnp.asarray(B1),
                w2=jnp.asarray(W2), b2=jnp.asarray(B2),
                cin_p=Cin_p, cout_p=Cout_p)


# ---------------------- pure-JAX reference (for checking) ---------------------
def ref_forward(x, raw, eps=1e-5):
    """Explicit conv -> BN(running stats) -> ReLU reference in NCL layout."""
    P = jax.lax.Precision.HIGHEST

    def conv1d(x, w, b):
        co, ci, k = w.shape
        pad = k // 2
        L = x.shape[-1]
        xp = jnp.pad(x, ((0, 0), (0, 0), (pad, pad)))
        y = sum(jnp.einsum("oi,nil->nol", w[:, :, t], xp[:, :, t:t + L], precision=P)
                for t in range(k))
        return y + b[None, :, None]

    def bn(x, p):
        s = p["gamma"] / jnp.sqrt(p["var"] + eps)
        return (x - p["mean"][None, :, None]) * s[None, :, None] + p["beta"][None, :, None]

    w, b = raw["b0c1"]; h = jax.nn.relu(bn(conv1d(x, w, b), raw["b0bn1"]))
    w, b = raw["b0c2"]; y0 = jax.nn.relu(bn(conv1d(h, w, b), raw["b0bn2"]))
    w, b = raw["b1c1"]; h = jax.nn.relu(bn(conv1d(x, w, b), raw["b1bn1"]))
    w, b = raw["b1c2"]; y1 = jax.nn.relu(bn(conv1d(h, w, b), raw["b1bn2"]))
    w, b = raw["res"];  res = conv1d(x, w, b)
    return jax.nn.relu(jnp.concatenate([y0, y1], axis=1) + res)


# ---------------------------------- main --------------------------------------
if __name__ == "__main__":
    key = jax.random.PRNGKey(0)
    k_x, k_p = jax.random.split(key)

    N, Cin, L = 4, 4, 128     # PyTorch Conv1d input (N, C, L)
    Cout = 8                  # -> grid=(2,) parallel steps, 256-lane slab per step

    x_ncl = jax.random.normal(k_x, (N, Cin, L), jnp.float32)

    raw = make_raw_params(k_p, Cin, Cout)
    packed = pack_params(raw, Cin, Cout)

    # f32 path: exact-ish validation against the HIGHEST-precision JAX reference.
    out_ncl = jax.block_until_ready(residual_inception_block(x_ncl, packed))
    ref = ref_forward(x_ncl, raw)
    np.testing.assert_allclose(np.asarray(out_ncl), np.asarray(ref), rtol=1e-5, atol=1e-5)
    assert out_ncl.shape == (N, Cout, L)

    # bf16 dot-input path (v6e/v7x MXU throughput); relaxed tolerance vs the f32 reference.
    out_bf16 = jax.block_until_ready(
        residual_inception_block(x_ncl, packed, use_bf16=True))
    np.testing.assert_allclose(np.asarray(out_bf16), np.asarray(ref), rtol=1e-1, atol=2e-1)

    print("KERNEL_OK")
</pallas_src>

<mosaic_0001>
module attributes {stable_mosaic.version = 11 : i64} {
  func.func @_rib_kernel(%arg0: i32, %arg1: memref<1x4x256xf32, #tpu.memory_space<vmem>>, %arg2: memref<24x4xf32, #tpu.memory_space<vmem>>, %arg3: memref<24x1xf32, #tpu.memory_space<vmem>>, %arg4: memref<24x16xf32, #tpu.memory_space<vmem>>, %arg5: memref<8x1xf32, #tpu.memory_space<vmem>>, %arg6: memref<1x8x256xf32, #tpu.memory_space<vmem>>) attributes {dimension_semantics = [#tpu.dimension_semantics<parallel>], iteration_bounds = array<i64: 2>, scalar_prefetch = 0 : i64, scratch_operands = 0 : i64, tpu.core_type = #tpu.core_type<tc>, window_params = [{transform_indices = @transform_0, window_bounds = array<i64: 1, 4, 256>}, {pipeline_mode = #tpu.pipeline_mode<synchronous>, transform_indices = @transform_1, window_bounds = array<i64: 24, 4>}, {pipeline_mode = #tpu.pipeline_mode<synchronous>, transform_indices = @transform_2, window_bounds = array<i64: 24, 1>}, {pipeline_mode = #tpu.pipeline_mode<synchronous>, transform_indices = @transform_3, window_bounds = array<i64: 24, 16>}, {pipeline_mode = #tpu.pipeline_mode<synchronous>, transform_indices = @transform_4, window_bounds = array<i64: 8, 1>}, {transform_indices = @transform_5, window_bounds = array<i64: 1, 8, 256>}]} {
    %c0 = arith.constant 0 : index
    %c0_0 = arith.constant 0 : index
    %c0_1 = arith.constant 0 : index
    %0 = vector.load %arg1[%c0, %c0_0, %c0_1] : memref<1x4x256xf32, #tpu.memory_space<vmem>>, vector<1x4x256xf32>
    %1 = vector.shape_cast %0 : vector<1x4x256xf32> to vector<4x256xf32>
    %c0_2 = arith.constant 0 : index
    %c0_3 = arith.constant 0 : index
    %2 = vector.load %arg2[%c0_2, %c0_3] : memref<24x4xf32, #tpu.memory_space<vmem>>, vector<24x4xf32>
    %c0_4 = arith.constant 0 : index
    %c0_5 = arith.constant 0 : index
    %3 = vector.load %arg4[%c0_4, %c0_5] : memref<24x16xf32, #tpu.memory_space<vmem>>, vector<24x16xf32>
    %cst = arith.constant dense<0.000000e+00> : vector<24x256xf32>
    %4 = tpu.matmul %2, %1, %cst {dimension_numbers = #tpu.dot_dimension_numbers<[1], [0], [0], [1], [0, 0, 1, 1], [], []>} : vector<24x4xf32>, vector<4x256xf32>, vector<24x256xf32> -> vector<24x256xf32>
    %c0_6 = arith.constant 0 : index
    %c0_7 = arith.constant 0 : index
    %5 = vector.load %arg3[%c0_6, %c0_7] : memref<24x1xf32, #tpu.memory_space<vmem>>, vector<24x1xf32>
    %6 = vector.broadcast %5 : vector<24x1xf32> to vector<24x256xf32>
    %7 = arith.addf %4, %6 : vector<24x256xf32>
    %8 = vector.extract_strided_slice %7 {offsets = [0, 0], sizes = [16, 256], strides = [1, 1]} : vector<24x256xf32> to vector<16x256xf32>
    %cst_8 = arith.constant 0.000000e+00 : f32
    %9 = vector.broadcast %cst_8 : f32 to vector<16x256xf32>
    %10 = arith.maximumf %8, %9 : vector<16x256xf32>
    %11 = vector.extract_strided_slice %7 {offsets = [16, 0], sizes = [8, 256], strides = [1, 1]} : vector<24x256xf32> to vector<8x256xf32>
    %cst_9 = arith.constant dense<0.000000e+00> : vector<24x256xf32>
    %12 = tpu.matmul %3, %10, %cst_9 {dimension_numbers = #tpu.dot_dimension_numbers<[1], [0], [0], [1], [0, 0, 1, 1], [], []>} : vector<24x16xf32>, vector<16x256xf32>, vector<24x256xf32> -> vector<24x256xf32>
    %13 = vector.extract_strided_slice %12 {offsets = [0, 0], sizes = [8, 256], strides = [1, 1]} : vector<24x256xf32> to vector<8x256xf32>
    %14 = vector.extract_strided_slice %12 {offsets = [8, 0], sizes = [8, 256], strides = [1, 1]} : vector<24x256xf32> to vector<8x256xf32>
    %15 = vector.extract_strided_slice %12 {offsets = [16, 0], sizes = [8, 256], strides = [1, 1]} : vector<24x256xf32> to vector<8x256xf32>
    %16 = tpu.iota {dimensions = array<i32: 1>} : vector<8x256xi32>
    %c127_i32 = arith.constant 127 : i32
    %17 = vector.broadcast %c127_i32 : i32 to vector<8x256xi32>
    %18 = arith.andi %16, %17 : vector<8x256xi32>
    %c0_i32 = arith.constant 0 : i32
    %19 = vector.broadcast %c0_i32 : i32 to vector<8x256xi32>
    %20 = arith.cmpi eq, %18, %19 : vector<8x256xi32>
    %c1_i32 = arith.constant 1 : i32
    %21 = tpu.dynamic_rotate %14 by %c1_i32 dim 1 : vector<8x256xf32>, i32 -> vector<8x256xf32>
    %cst_10 = arith.constant 0.000000e+00 : f32
    %22 = vector.broadcast %cst_10 : f32 to vector<8x256xf32>
    %23 = arith.select %20, %22, %21 : vector<8x256xi1>, vector<8x256xf32>
    %c127_i32_11 = arith.constant 127 : i32
    %24 = vector.broadcast %c127_i32_11 : i32 to vector<8x256xi32>
    %25 = arith.cmpi eq, %18, %24 : vector<8x256xi32>
    %c255_i32 = arith.constant 255 : i32
    %26 = tpu.dynamic_rotate %15 by %c255_i32 dim 1 : vector<8x256xf32>, i32 -> vector<8x256xf32>
    %cst_12 = arith.constant 0.000000e+00 : f32
    %27 = vector.broadcast %cst_12 : f32 to vector<8x256xf32>
    %28 = arith.select %25, %27, %26 : vector<8x256xi1>, vector<8x256xf32>
    %29 = arith.addf %13, %23 : vector<8x256xf32>
    %30 = arith.addf %29, %28 : vector<8x256xf32>
    %c0_13 = arith.constant 0 : index
    %c0_14 = arith.constant 0 : index
    %31 = vector.load %arg5[%c0_13, %c0_14] : memref<8x1xf32, #tpu.memory_space<vmem>>, vector<8x1xf32>
    %32 = vector.broadcast %31 : vector<8x1xf32> to vector<8x256xf32>
    %33 = arith.addf %30, %32 : vector<8x256xf32>
    %cst_15 = arith.constant 0.000000e+00 : f32
    %34 = vector.broadcast %cst_15 : f32 to vector<8x256xf32>
    %35 = arith.maximumf %33, %34 : vector<8x256xf32>
    %36 = arith.addf %35, %11 : vector<8x256xf32>
    %cst_16 = arith.constant 0.000000e+00 : f32
    %37 = vector.broadcast %cst_16 : f32 to vector<8x256xf32>
    %38 = arith.maximumf %36, %37 : vector<8x256xf32>
    %c0_17 = arith.constant 0 : index
    %c0_18 = arith.constant 0 : index
    %c0_19 = arith.constant 0 : index
    %39 = vector.load %arg6[%c0_17, %c0_18, %c0_19] : memref<1x8x256xf32, #tpu.memory_space<vmem>>, vector<1x8x256xf32>
    %40 = vector.shape_cast %39 : vector<1x8x256xf32> to vector<8x256xf32>
    %41 = vector.shape_cast %38 : vector<8x256xf32> to vector<1x8x256xf32>
    tpu.vector_store %arg6[%c0_17, %c0_18, %c0_19], %41 {strides = array<i32>} : memref<1x8x256xf32, #tpu.memory_space<vmem>>, vector<1x8x256xf32>,
    return
  }
  func.func @transform_0(%arg0: i32) -> (i32, i32, i32) {
    %c0_i32 = arith.constant 0 : i32
    %c0_i32_0 = arith.constant 0 : i32
    %c0_i32_1 = arith.constant 0 : i32
    return %arg0, %c0_i32, %c0_i32_0 : i32, i32, i32
  }
  func.func @transform_1(%arg0: i32) -> (i32, i32) {
    %c0_i32 = arith.constant 0 : i32
    %c0_i32_0 = arith.constant 0 : i32
    %c0_i32_1 = arith.constant 0 : i32
    return %c0_i32, %c0_i32_0 : i32, i32
  }
  func.func @transform_2(%arg0: i32) -> (i32, i32) {
    %c0_i32 = arith.constant 0 : i32
    %c0_i32_0 = arith.constant 0 : i32
    %c0_i32_1 = arith.constant 0 : i32
    return %c0_i32, %c0_i32_0 : i32, i32
  }
  func.func @transform_3(%arg0: i32) -> (i32, i32) {
    %c0_i32 = arith.constant 0 : i32
    %c0_i32_0 = arith.constant 0 : i32
    %c0_i32_1 = arith.constant 0 : i32
    return %c0_i32, %c0_i32_0 : i32, i32
  }
  func.func @transform_4(%arg0: i32) -> (i32, i32) {
    %c0_i32 = arith.constant 0 : i32
    %c0_i32_0 = arith.constant 0 : i32
    %c0_i32_1 = arith.constant 0 : i32
    return %c0_i32, %c0_i32_0 : i32, i32
  }
  func.func @transform_5(%arg0: i32) -> (i32, i32, i32) {
    %c0_i32 = arith.constant 0 : i32
    %c0_i32_0 = arith.constant 0 : i32
    %c0_i32_1 = arith.constant 0 : i32
    return %arg0, %c0_i32, %c0_i32_0 : i32, i32, i32
  }
}

</mosaic_0001>

<llo_original>
// kernel: tpu_custom_call.1
$region0: #{tpu_custom_call.1}
  #allocation0 [shape = 'u32[]', space=smem, size = 0x4, offset = 0x4, fixed_abs, tag = 'smem constant byte address 0x4 - core index']
  #allocation1 [shape = 'u32[144,128]{1,0:T(1,128)}', space=vmem, size = 0x12000, scoped, tag = 'internal scratch']
  %s0 = inlined_call_operand.vmem [shape: f32[2,4,256], index: 0, kind: input, shape index: {}]
  %s1 = inlined_call_operand.vmem [shape: f32[24,4], index: 1, kind: input, shape index: {}]
  %s2 = inlined_call_operand.vmem [shape: f32[24,1], index: 2, kind: input, shape index: {}]
  %s3 = inlined_call_operand.vmem [shape: f32[24,16], index: 3, kind: input, shape index: {}]
  %s4 = inlined_call_operand.vmem [shape: f32[8,1], index: 4, kind: input, shape index: {}]
  %s5 = inlined_call_operand.hbm [shape: f32[2,8,256], index: 5, kind: output, shape index: {}]
  %s6 = sld [smem:[#allocation0]]
  $region53: #{tpu_custom_call.1} parent=0
    _
  %s8 = ssub.s32 1, %s6
  %s9 = scalar_select 0, %s8, %s6
  $region1: #{tpu_custom_call.1} parent=0
    #allocation2 [shape = 'u8[16384]{0}', space=vmem, size = 0x4000, scoped, tag = 'output window, operand 0']
    #allocation3 [shape = 's32[2]{0}', space=sflag, size = 0x8, scoped, tag = 'scoped memory for tpu_custom_call.1']
    %10 = vsyncpa [#allocation3], 0
    %s11 = scalar_lea.sflag [#allocation3], 1
    %12 = vsyncpa %s11, 0
    loop: start=0, step=1, limit=4
    $region2: #{tpu_custom_call.1} parent=1 // loop_pre_header
      _
    $region3: #{tpu_custom_call.1} parent=1 // loop_header
      %s14 = sphi 0, %s18
      %p15 = scmp.ge.s32.totalorder %s14, 4
      %s24 = sphi 0, %s26
      %s27 = sphi 0, %s24
      %s28 = sphi 0, %s27
      %s44 = sphi 0, %s28
      %s48 = sphi 0, %s48
      %s50 = sphi 0, %s48
      %s51 = sphi 0, %s50
      %s65 = sphi 0, %s51
      %s69 = sphi 0, %s69
      %s71 = sphi 0, %s69
      %s72 = sphi 0, %s71
      %s86 = sphi 0, %s72
      %s90 = sphi 0, %s90
      %s92 = sphi 0, %s90
      %s93 = sphi 0, %s92
      %s107 = sphi 0, %s93
      %s111 = sphi 0, %s111
      %s113 = sphi 0, %s111
      %s114 = sphi 0, %s113
      %s128 = sphi 0, %s114
      %s134 = sphi 0, %s136
      %s137 = sphi 0, %s134
      %s138 = sphi 0, %s137
      %s154 = sphi 0, %s138
    $region4: #{tpu_custom_call.1} parent=1 // loop_header_branch
      %17 = sbr.rel (%p15) target = $region8
    $region5: #{tpu_custom_call.1} parent=1 // loop_body
      %s19 = ssub.s32 %s14, 1
      %s20 = ssub.s32 %s14, 2
      %s21 = sadd.s32 %s14, 1
      %s22 = ssub.s32 %s14, %s21
      %p23 = scmp.eq.s32.totalorder %s22, 0
      %s25 = sadd.s32 %s24, 1
      %s26 = scalar_select %p23, %s24, %s25
      %p29 = pneg %p23
      %p30 = scmp.eq.s32.totalorder %s14, 1
      %p31 = por %p29, %p30
      %p32 = scmp.ne.s32.totalorder %s24, %s27
      %p33 = scmp.eq.s32.totalorder %s14, 0
      %p34 = por %p32, %p33
      %p35 = scmp.ne.s32.totalorder %s24, %s27
      %p36 = scmp.eq.s32.totalorder %s19, 1
      %p37 = por %p35, %p36
      %p38 = scmp.ne.s32.totalorder %s27, %s28
      %p39 = scmp.eq.s32.totalorder %s19, 0
      %p40 = por %p38, %p39
      %p41 = scmp.ne.s32.totalorder %s27, %s28
      %p42 = scmp.eq.s32.totalorder %s20, 1
      %p43 = por %p41, %p42
      %p45 = scmp.ne.s32.totalorder %s28, %s44
      %p46 = scmp.eq.s32.totalorder %s20, 0
      %p47 = por %p45, %p46
      %s49 = sadd.s32 %s48, 1
      %p52 = scmp.eq.s32.totalorder %s14, 1
      %p53 = scmp.ne.s32.totalorder %s48, %s50
      %p54 = scmp.eq.s32.totalorder %s14, 0
      %p55 = por %p53, %p54
      %p56 = scmp.ne.s32.totalorder %s48, %s50
      %p57 = scmp.eq.s32.totalorder %s19, 1
      %p58 = por %p56, %p57
      %p59 = scmp.ne.s32.totalorder %s50, %s51
      %p60 = scmp.eq.s32.totalorder %s19, 0
      %p61 = por %p59, %p60
      %p62 = scmp.ne.s32.totalorder %s50, %s51
      %p63 = scmp.eq.s32.totalorder %s20, 1
      %p64 = por %p62, %p63
      %p66 = scmp.ne.s32.totalorder %s51, %s65
      %p67 = scmp.eq.s32.totalorder %s20, 0
      %p68 = por %p66, %p67
      %s70 = sadd.s32 %s69, 1
      %p73 = scmp.eq.s32.totalorder %s14, 1
      %p74 = scmp.ne.s32.totalorder %s69, %s71
      %p75 = scmp.eq.s32.totalorder %s14, 0
      %p76 = por %p74, %p75
      %p77 = scmp.ne.s32.totalorder %s69, %s71
      %p78 = scmp.eq.s32.totalorder %s19, 1
      %p79 = por %p77, %p78
      %p80 = scmp.ne.s32.totalorder %s71, %s72
      %p81 = scmp.eq.s32.totalorder %s19, 0
      %p82 = por %p80, %p81
      %p83 = scmp.ne.s32.totalorder %s71, %s72
      %p84 = scmp.eq.s32.totalorder %s20, 1
      %p85 = por %p83, %p84
      %p87 = scmp.ne.s32.totalorder %s72, %s86
      %p88 = scmp.eq.s32.totalorder %s20, 0
      %p89 = por %p87, %p88
      %s91 = sadd.s32 %s90, 1
      %p94 = scmp.eq.s32.totalorder %s14, 1
      %p95 = scmp.ne.s32.totalorder %s90, %s92
      %p96 = scmp.eq.s32.totalorder %s14, 0
      %p97 = por %p95, %p96
      %p98 = scmp.ne.s32.totalorder %s90, %s92
      %p99 = scmp.eq.s32.totalorder %s19, 1
      %p100 = por %p98, %p99
      %p101 = scmp.ne.s32.totalorder %s92, %s93
      %p102 = scmp.eq.s32.totalorder %s19, 0
      %p103 = por %p101, %p102
      %p104 = scmp.ne.s32.totalorder %s92, %s93
      %p105 = scmp.eq.s32.totalorder %s20, 1
      %p106 = por %p104, %p105
      %p108 = scmp.ne.s32.totalorder %s93, %s107
      %p109 = scmp.eq.s32.totalorder %s20, 0
      %p110 = por %p108, %p109
      %s112 = sadd.s32 %s111, 1
      %p115 = scmp.eq.s32.totalorder %s14, 1
      %p116 = scmp.ne.s32.totalorder %s111, %s113
      %p117 = scmp.eq.s32.totalorder %s14, 0
      %p118 = por %p116, %p117
      %p119 = scmp.ne.s32.totalorder %s111, %s113
      %p120 = scmp.eq.s32.totalorder %s19, 1
      %p121 = por %p119, %p120
      %p122 = scmp.ne.s32.totalorder %s113, %s114
      %p123 = scmp.eq.s32.totalorder %s19, 0
      %p124 = por %p122, %p123
      %p125 = scmp.ne.s32.totalorder %s113, %s114
      %p126 = scmp.eq.s32.totalorder %s20, 1
      %p127 = por %p125, %p126
      %p129 = scmp.ne.s32.totalorder %s114, %s128
      %p130 = scmp.eq.s32.totalorder %s20, 0
      %p131 = por %p129, %p130
      %s132 = ssub.s32 %s14, %s21
      %p133 = scmp.eq.s32.totalorder %s132, 0
      %s135 = sadd.s32 %s134, 1
      %s136 = scalar_select %p133, %s134, %s135
      %p139 = pneg %p133
      %p140 = scmp.eq.s32.totalorder %s14, 1
      %p141 = por %p139, %p140
      %p142 = scmp.ne.s32.totalorder %s134, %s137
      %p143 = scmp.eq.s32.totalorder %s14, 0
      %p144 = por %p142, %p143
      %p145 = scmp.ne.s32.totalorder %s134, %s137
      %p146 = scmp.eq.s32.totalorder %s19, 1
      %p147 = por %p145, %p146
      %p148 = scmp.ne.s32.totalorder %s137, %s138
      %p149 = scmp.eq.s32.totalorder %s19, 0
      %p150 = por %p148, %p149
      %p151 = scmp.ne.s32.totalorder %s137, %s138
      %p152 = scmp.eq.s32.totalorder %s20, 1
      %p153 = por %p151, %p152
      %p155 = scmp.ne.s32.totalorder %s138, %s154
      %p156 = scmp.eq.s32.totalorder %s20, 0
      %p157 = por %p155, %p156
      %p158 = scmp.le.s32.totalorder 1, %s14
      %p159 = scmp.lt.s32.totalorder %s14, 3
      %p160 = pnand %p158, %p159
      %p161 = pneg %p160
      // Predicated region
      $region9: #{tpu_custom_call.1} parent=5 // pred_check
        _
      $region10: #{tpu_custom_call.1} parent=5 // pred_check_branch
        %163 = sbr.rel (%p160) target = $region12
      $region11: #{tpu_custom_call.1} parent=5 // pred_region
        %s164 = ssub.s32 %s14, 1
        // Predicated region
        $region13: #{tpu_custom_call.1} parent=11 // pred_check
          %p165 = pneg %p61
        $region14: #{tpu_custom_call.1} parent=11 // pred_check_branch
          %167 = sbr.rel (%p165) target = $region16
        $region15: #{tpu_custom_call.1} parent=11 // pred_region
          _
        $region16: #{tpu_custom_call.1} parent=11 // pred_fallthru
          _
        // Predicated region
        $region17: #{tpu_custom_call.1} parent=11 // pred_check
          %p168 = pneg %p82
        $region18: #{tpu_custom_call.1} parent=11 // pred_check_branch
          %170 = sbr.rel (%p168) target = $region20
        $region19: #{tpu_custom_call.1} parent=11 // pred_region
          _
        $region20: #{tpu_custom_call.1} parent=11 // pred_fallthru
          _
        // Predicated region
        $region21: #{tpu_custom_call.1} parent=11 // pred_check
          %p171 = pneg %p103
        $region22: #{tpu_custom_call.1} parent=11 // pred_check_branch
          %173 = sbr.rel (%p171) target = $region24
        $region23: #{tpu_custom_call.1} parent=11 // pred_region
          _
        $region24: #{tpu_custom_call.1} parent=11 // pred_fallthru
          _
        // Predicated region
        $region25: #{tpu_custom_call.1} parent=11 // pred_check
          %p174 = pneg %p124
        $region26: #{tpu_custom_call.1} parent=11 // pred_check_branch
          %176 = sbr.rel (%p174) target = $region28
        $region27: #{tpu_custom_call.1} parent=11 // pred_region
          _
        $region28: #{tpu_custom_call.1} parent=11 // pred_fallthru
          _
      $region12: #{tpu_custom_call.1} parent=5 // pred_fallthru
        _
      %p177 = scmp.lt.s32.totalorder %s14, 2
      // Predicated region
      $region29: #{tpu_custom_call.1} parent=5 // pred_check
        %p178 = pneg %p177
      $region30: #{tpu_custom_call.1} parent=5 // pred_check_branch
        %180 = sbr.rel (%p178) target = $region32
      $region31: #{tpu_custom_call.1} parent=5 // pred_region
        // Predicated region
        $region33: #{tpu_custom_call.1} parent=31 // pred_check
          %p181 = pneg %p34
        $region34: #{tpu_custom_call.1} parent=31 // pred_check_branch
          %183 = sbr.rel (%p181) target = $region36
        $region35: #{tpu_custom_call.1} parent=31 // pred_region
          %p184 = scmp.lt.s32.totalorder %s14, 1
          %s185 = scalar_select %p184, %s14, 1
          %s186 = smul.addr %s185, 2
          %s187 = smul.addr %s186, 4
          %s188 = scalar_lea.vmem %s0, %s187
        $region36: #{tpu_custom_call.1} parent=31 // pred_fallthru
          _
      $region32: #{tpu_custom_call.1} parent=5 // pred_fallthru
        _
      %p189 = scmp.le.s32.totalorder 1, %s14
      %p190 = scmp.lt.s32.totalorder %s14, 3
      %p191 = pnand %p189, %p190
      %p192 = pneg %p191
      // Predicated region
      $region37: #{tpu_custom_call.1} parent=5 // pred_check
        _
      $region38: #{tpu_custom_call.1} parent=5 // pred_check_branch
        %194 = sbr.rel (%p191) target = $region40
      $region39: #{tpu_custom_call.1} parent=5 // pred_region
        %s195 = ssub.s32 %s14, 1
        %p196 = scmp.lt.s32.totalorder %s19, 1
        %s197 = scalar_select %p196, %s19, 1
        %s198 = smul.addr %s197, 2
        %s199 = smul.addr %s198, 4
        %s200 = scalar_lea.vmem %s0, %s199
        %p201 = pneg %p40
        %p202 = pneg %p37
        %p203 = pneg %p61
        %p204 = pneg %p58
        %p205 = pneg %p82
        %p206 = pneg %p79
        %p207 = pneg %p103
        %p208 = pneg %p100
        %p209 = pneg %p124
        %p210 = pneg %p121
        %p211 = pneg %p150
        %p212 = pneg %p147
        %s213 = sand.u32 %s137, 1
        %s214 = scalar_lea.sflag [#allocation3], %s213
        %s215 = sand.u32 %s137, 1
        %s216 = smul.addr %s215, 16
        %s217 = scalar_lea.vmem [#allocation2], %s216
        %p218 = scmp.lt.s32.totalorder %s19, 1
        %s219 = scalar_select %p218, %s19, 1
        %s220 = smul.addr %s219, 2
        %s221 = smul.addr %s220, 4
        %s222 = scalar_lea.vmem %s0, %s221
        %v223 = vld [vmem:[%s222] sm:$0xff]
        %v224 = vld [vmem:[%s1] sm:$0xff]
        %v225 = vld [vmem:[%s1 + $0x8] sm:$0xff]
        %v226 = vld [vmem:[%s1 + $0x10] sm:$0xff]
        %v227 = vld [vmem:[%s3] sm:$0xff]
        %v228 = vld [vmem:[%s3 + $0x8] sm:$0xff]
        %v229 = vld [vmem:[%s3 + $0x10] sm:$0xff]
        %v230 = vld [vmem:[%s2] sm:$0xff]
        %v231 = vld [vmem:[%s2 + $0x8] sm:$0xff]
        %v232 = vld [vmem:[%s2 + $0x10] sm:$0xff]
        %234 = vset.pattern.permute.xlu0 0
        %235 = vperm.xlu0 %234, %v230
        %v236 = vpop.permute.xlu0 %235
        %239 = vset.pattern.permute.xlu0 0
        %240 = vperm.xlu0 %239, %v231
        %v241 = vpop.permute.xlu0 %240
        %244 = vset.pattern.permute.xlu0 0
        %245 = vperm.xlu0 %244, %v232
        %v246 = vpop.permute.xlu0 %245
        %v249 = vcombine.high %v223, %v223
        %vm250 = vcmask 31744
        %v252 = vsel %vm250, %v224, 0
        %v255 = vsel %vm250, %v225, 0
        %v258 = vsel %vm250, %v226, 0
        %vm260 = vcmask 1043456
        %v261 = vsel %vm260, %v223, 0
        %v263 = vsel %vm260, %v249, 0
        %265 = vmatprep.subr.mxu0 %v263
        %266 = vmatpush1.msra.mxu0 %v261
        %267 = vmatprep.subr.mxu0 0.0
        %268 = vmatpush1.msra.mxu0 0.0
        %269 = vmatprep.subr.mxu0 0.0
        %270 = vmatpush1.msra.mxu0 0.0
        %271 = vmatprep.subr.mxu0 0.0
        %272 = vmatpush1.msra.mxu0 0.0
        %273 = vmatprep.subr.mxu0 0.0
        %274 = vmatpush1.msra.mxu0 0.0
        %275 = vmatprep.subr.mxu0 0.0
        %276 = vmatpush1.msra.mxu0 0.0
        %277 = vmatprep.subr.mxu0 0.0
        %278 = vmatpush1.msra.mxu0 0.0
        %279 = vmatprep.subr.mxu0 0.0
        %280 = vmatpush1.msra.mxu0 0.0
        %281 = vmatprep.subr.mxu0 0.0
        %282 = vmatpush1.msra.mxu0 0.0
        %283 = vmatprep.subr.mxu0 0.0
        %284 = vmatpush1.msra.mxu0 0.0
        %285 = vmatprep.subr.mxu0 0.0
        %286 = vmatpush1.msra.mxu0 0.0
        %287 = vmatprep.subr.mxu0 0.0
        %288 = vmatpush1.msra.mxu0 0.0
        %289 = vmatprep.subr.mxu0 0.0
        %290 = vmatpush1.msra.mxu0 0.0
        %291 = vmatprep.subr.mxu0 0.0
        %292 = vmatpush1.msra.mxu0 0.0
        %293 = vmatprep.subr.mxu0 0.0
        %294 = vmatpush1.msra.mxu0 0.0
        %295 = vmatprep.subr.mxu0 0.0
        %296 = vmatpush1.msra.mxu0 0.0
        %297 = vmatprep.subr.mxu0 0.0
        %298 = vmatpush1.msra.mxu0 0.0
        %299 = vmatprep.subr.mxu0 0.0
        %300 = vmatpush1.msra.mxu0 0.0
        %301 = vmatprep.subr.mxu0 0.0
        %302 = vmatpush1.msra.mxu0 0.0
        %303 = vmatprep.subr.mxu0 0.0
        %304 = vmatpush1.msra.mxu0 0.0
        %305 = vmatprep.subr.mxu0 0.0
        %306 = vmatpush1.msra.mxu0 0.0
        %307 = vmatprep.subr.mxu0 0.0
        %308 = vmatpush1.msra.mxu0 0.0
        %309 = vmatprep.subr.mxu0 0.0
        %310 = vmatpush1.msra.mxu0 0.0
        %311 = vmatprep.subr.mxu0 0.0
        %312 = vmatpush1.msra.mxu0 0.0
        %313 = vmatprep.subr.mxu0 0.0
        %314 = vmatpush1.msra.mxu0 0.0
        %315 = vmatprep.subr.mxu0 0.0
        %316 = vmatpush1.msra.mxu0 0.0
        %317 = vmatprep.subr.mxu0 0.0
        %318 = vmatpush1.msra.mxu0 0.0
        %319 = vmatprep.subr.mxu0 0.0
        %320 = vmatpush1.msra.mxu0 0.0
        %321 = vmatprep.subr.mxu0 0.0
        %322 = vmatpush1.msra.mxu0 0.0
        %323 = vmatprep.subr.mxu0 0.0
        %324 = vmatpush1.msra.mxu0 0.0
        %325 = vmatprep.subr.mxu0 0.0
        %326 = vmatpush1.msra.mxu0 0.0
        %327 = vmatprep.subr.mxu0 0.0
        %328 = vmatpush1.msra.mxu0 0.0
        %329 = vmatprep.mubr.f32.mxu0 0.0
        %330 = vmatmul.mubr.f32.gmra.mrb[0].mxu0 %v252
        %v331 = vpop.f32.mrb[0].mxu0
        %v332 = vadd.f32 %v236, %v331
        %v333 = vpop.f32.mrb[0].mxu0
        %v334 = vadd.f32 %v236, %v333
        %335 = vmatprep.mubr.f32.mxu0 0.0
        %336 = vmatmul.mubr.f32.gmra.mrb[0].mxu0 %v255
        %v337 = vpop.f32.mrb[0].mxu0
        %v338 = vadd.f32 %v241, %v337
        %v339 = vpop.f32.mrb[0].mxu0
        %v340 = vadd.f32 %v241, %v339
        %341 = vmatprep.mubr.f32.mxu0 0.0
        %342 = vmatmul.mubr.f32.gmra.mrb[0].mxu0 %v258
        %v343 = vpop.f32.mrb[0].mxu0
        %v344 = vadd.f32 %v246, %v343
        %v345 = vpop.f32.mrb[0].mxu0
        %v346 = vadd.f32 %v246, %v345
        %347 = vdwg.mxu0
        %v348 = vmax.f32 %v332, 0.0
        %v349 = vmax.f32 %v334, 0.0
        %v350 = vmax.f32 %v338, 0.0
        %v351 = vmax.f32 %v340, 0.0
        %vm352 = vcmask 130048
        %v354 = vsel %vm352, %v227, 0
        %v357 = vsel %vm352, %v228, 0
        %v360 = vsel %vm352, %v229, 0
        %362 = vmatprep.subr.mxu0 %v349
        %363 = vmatpush1.msra.mxu0 %v348
        %364 = vmatprep.subr.mxu0 %v351
        %365 = vmatpush1.msra.mxu0 %v350
        %366 = vmatprep.subr.mxu0 0.0
        %367 = vmatpush1.msra.mxu0 0.0
        %368 = vmatprep.subr.mxu0 0.0
        %369 = vmatpush1.msra.mxu0 0.0
        %370 = vmatprep.subr.mxu0 0.0
        %371 = vmatpush1.msra.mxu0 0.0
        %372 = vmatprep.subr.mxu0 0.0
        %373 = vmatpush1.msra.mxu0 0.0
        %374 = vmatprep.subr.mxu0 0.0
        %375 = vmatpush1.msra.mxu0 0.0
        %376 = vmatprep.subr.mxu0 0.0
        %377 = vmatpush1.msra.mxu0 0.0
        %378 = vmatprep.subr.mxu0 0.0
        %379 = vmatpush1.msra.mxu0 0.0
        %380 = vmatprep.subr.mxu0 0.0
        %381 = vmatpush1.msra.mxu0 0.0
        %382 = vmatprep.subr.mxu0 0.0
        %383 = vmatpush1.msra.mxu0 0.0
        %384 = vmatprep.subr.mxu0 0.0
        %385 = vmatpush1.msra.mxu0 0.0
        %386 = vmatprep.subr.mxu0 0.0
        %387 = vmatpush1.msra.mxu0 0.0
        %388 = vmatprep.subr.mxu0 0.0
        %389 = vmatpush1.msra.mxu0 0.0
        %390 = vmatprep.subr.mxu0 0.0
        %391 = vmatpush1.msra.mxu0 0.0
        %392 = vmatprep.subr.mxu0 0.0
        %393 = vmatpush1.msra.mxu0 0.0
        %394 = vmatprep.subr.mxu0 0.0
        %395 = vmatpush1.msra.mxu0 0.0
        %396 = vmatprep.subr.mxu0 0.0
        %397 = vmatpush1.msra.mxu0 0.0
        %398 = vmatprep.subr.mxu0 0.0
        %399 = vmatpush1.msra.mxu0 0.0
        %400 = vmatprep.subr.mxu0 0.0
        %401 = vmatpush1.msra.mxu0 0.0
        %402 = vmatprep.subr.mxu0 0.0
        %403 = vmatpush1.msra.mxu0 0.0
        %404 = vmatprep.subr.mxu0 0.0
        %405 = vmatpush1.msra.mxu0 0.0
        %406 = vmatprep.subr.mxu0 0.0
        %407 = vmatpush1.msra.mxu0 0.0
        %408 = vmatprep.subr.mxu0 0.0
        %409 = vmatpush1.msra.mxu0 0.0
        %410 = vmatprep.subr.mxu0 0.0
        %411 = vmatpush1.msra.mxu0 0.0
        %412 = vmatprep.subr.mxu0 0.0
        %413 = vmatpush1.msra.mxu0 0.0
        %414 = vmatprep.subr.mxu0 0.0
        %415 = vmatpush1.msra.mxu0 0.0
        %416 = vmatprep.subr.mxu0 0.0
        %417 = vmatpush1.msra.mxu0 0.0
        %418 = vmatprep.subr.mxu0 0.0
        %419 = vmatpush1.msra.mxu0 0.0
        %420 = vmatprep.subr.mxu0 0.0
        %421 = vmatpush1.msra.mxu0 0.0
        %422 = vmatprep.subr.mxu0 0.0
        %423 = vmatpush1.msra.mxu0 0.0
        %424 = vmatprep.subr.mxu0 0.0
        %425 = vmatpush1.msra.mxu0 0.0
        %426 = vmatprep.mubr.f32.mxu0 0.0
        %427 = vmatmul.mubr.f32.gmra.mrb[0].mxu0 %v354
        %v428 = vpop.f32.mrb[0].mxu0
        %v429 = vadd.f32 0.0, %v428
        %v430 = vpop.f32.mrb[0].mxu0
        %v431 = vadd.f32 0.0, %v430
        %432 = vmatprep.mubr.f32.mxu0 0.0
        %433 = vmatmul.mubr.f32.gmra.mrb[0].mxu0 %v357
        %v434 = vpop.f32.mrb[0].mxu0
        %v435 = vadd.f32 0.0, %v434
        %v436 = vpop.f32.mrb[0].mxu0
        %v437 = vadd.f32 0.0, %v436
        %438 = vmatprep.mubr.f32.mxu0 0.0
        %439 = vmatmul.mubr.f32.gmra.mrb[0].mxu0 %v360
        %v440 = vpop.f32.mrb[0].mxu0
        %v441 = vadd.f32 0.0, %v440
        %v442 = vpop.f32.mrb[0].mxu0
        %v443 = vadd.f32 0.0, %v442
        %444 = vdwg.mxu0
        %v445 = vlaneseq
        %v446 = vand.u32 %v445, 127
        %v447 = vadd.s32 %v446, 128
        %v448 = vand.u32 %v446, 127
        %v449 = vand.u32 %v447, 127
        %vm450 = vcmp.eq.s32.totalorder %v448, 0
        %vm451 = vcmp.eq.s32.totalorder %v449, 0
        %452 = vrot.lane.b32.xlu0 %v435, 1
        %v453 = vpop.permute.xlu0 %452
        %454 = vrot.lane.b32.xlu0 %v437, 1
        %v455 = vpop.permute.xlu0 %454
        %vm456 = vcmp.lt.s32.totalorder %v446, 1
        %v457 = vsel %vm456, %v453, %v455
        %v458 = vsel %vm456, %v455, %v453
        %v459 = vsel %vm450, 0.0, %v458
        %v460 = vsel %vm451, 0.0, %v457
        %vm461 = vcmp.eq.s32.totalorder %v448, 127
        %vm462 = vcmp.eq.s32.totalorder %v449, 127
        %463 = vrot.lane.b32.xlu0 %v441, 127
        %v464 = vpop.permute.xlu0 %463
        %465 = vrot.lane.b32.xlu0 %v443, 127
        %v466 = vpop.permute.xlu0 %465
        %vm467 = vcmp.lt.s32.totalorder %v446, 127
        %v468 = vsel %vm467, %v464, %v466
        %v469 = vsel %vm467, %v466, %v464
        %v470 = vsel %vm461, 0.0, %v468
        %v471 = vsel %vm462, 0.0, %v469
        %v472 = vadd.f32 %v429, %v459
        %v473 = vadd.f32 %v431, %v460
        %v474 = vadd.f32 %v472, %v470
        %v475 = vadd.f32 %v473, %v471
        %v476 = vld [vmem:[%s4] sm:$0xff]
        %478 = vset.pattern.permute.xlu0 0
        %479 = vperm.xlu0 %478, %v476
        %v480 = vpop.permute.xlu0 %479
        %v482 = vadd.f32 %v474, %v480
        %v483 = vadd.f32 %v475, %v480
        %v484 = vmax.f32 %v482, 0.0
        %v485 = vmax.f32 %v483, 0.0
        %v486 = vadd.f32 %v484, %v344
        %v487 = vadd.f32 %v485, %v346
        %v488 = vmax.f32 %v486, 0.0
        %v489 = vmax.f32 %v487, 0.0
        %490 = vst [vmem:[%s217] sm:$0xff] %v488
        %491 = vst [vmem:[%s217 + $0x8] sm:$0xff] %v489
        %s492 = sand.u32 %s137, 1
        %s493 = scalar_lea.sflag [#allocation3], %s492
        %s494 = sand.u32 %s137, 1
        %s495 = smul.addr %s494, 16
        %s496 = scalar_lea.vmem [#allocation2], %s495
        // Predicated region
        $region41: #{tpu_custom_call.1} parent=39 // pred_check
          %p497 = pneg %p147
        $region42: #{tpu_custom_call.1} parent=39 // pred_check_branch
          %499 = sbr.rel (%p497) target = $region44
        $region43: #{tpu_custom_call.1} parent=39 // pred_region
          %s501 = ssub.s32 256, 256
          %502 = vsyncadd %s493, %s501
          %s503 = smul.addr %s19, 2
          %s504 = smul.addr %s503, 128
          %s505 = scalar_lea.hbm %s5, %s504
          %s507 = sshll.u32 %s496, 4
          %s508 = int_to_ptr.vmem [resolvable:$true] %s507
          %510 = dma.vmem_to_hbm [thread:$0]  %s508, 256, %s505, %s493
        $region44: #{tpu_custom_call.1} parent=39 // pred_fallthru
          _
      $region40: #{tpu_custom_call.1} parent=5 // pred_fallthru
        _
      %p511 = scmp.le.s32.totalorder 2, %s14
      // Predicated region
      $region45: #{tpu_custom_call.1} parent=5 // pred_check
        %p512 = pneg %p511
      $region46: #{tpu_custom_call.1} parent=5 // pred_check_branch
        %514 = sbr.rel (%p512) target = $region48
      $region47: #{tpu_custom_call.1} parent=5 // pred_region
        %s515 = ssub.s32 %s14, 2
        // Predicated region
        $region49: #{tpu_custom_call.1} parent=47 // pred_check
          %p516 = pneg %p153
        $region50: #{tpu_custom_call.1} parent=47 // pred_check_branch
          %518 = sbr.rel (%p516) target = $region52
        $region51: #{tpu_custom_call.1} parent=47 // pred_region
          %s519 = sand.u32 %s138, 1
          %s520 = scalar_lea.sflag [#allocation3], %s519
          %s521 = sand.u32 %s138, 1
          %s522 = smul.addr %s521, 16
          %s523 = scalar_lea.vmem [#allocation2], %s522
          %524 = dma.done %s520, 256
        $region52: #{tpu_custom_call.1} parent=47 // pred_fallthru
          _
      $region48: #{tpu_custom_call.1} parent=5 // pred_fallthru
        _
    $region6: #{tpu_custom_call.1} parent=1 // loop_footer
      %s18 = sadd.s32 1, %s14
    $region7: #{tpu_custom_call.1} parent=1 // loop_footer_branch
      %13 = sbr.rel target = $region3
    $region8: #{tpu_custom_call.1} parent=1 // loop_exit
      _
    %525 = vsyncpa [#allocation3], 1
    %s526 = scalar_lea.sflag [#allocation3], 1
    %527 = vsyncpa %s526, 1

</llo_original>
